<compile_context>
chip_gen: v7x
topology: tpu7x:2x2x1
jax: 0.10.0
libtpu: 0.0.40
codegen_flags: <defaults>
</compile_context>

<pallas_src>
import jax
import jax.numpy as jnp
from jax.experimental import pallas as pl
from jax.experimental.pallas import tpu as pltpu


_TARGET_BLOCK_BYTES = 2 * 1024 * 1024  # ~2 MiB input block; double-buffered
                                       # in+out stays well under the 16 MiB
                                       # v5e scoped default and v7x's 32 MiB.


def _make_lerp_kernel(threshold):
    def kernel(x_ref, avg_ref, o_ref):
        x = x_ref[...]            # (bB, ml, D)
        avg = avg_ref[...]        # (1, 1, D) -> broadcasts
        # torch.lerp(avg, x, t) == avg + t * (x - avg)
        o_ref[...] = avg + threshold * (x - avg)
    return kernel


def _make_masked_kernel(threshold, max_layer):
    def kernel(x_ref, avg_ref, o_ref):
        x = x_ref[...]            # (bB, L, D)
        avg = avg_ref[...]
        interp = avg + threshold * (x - avg)
        layer_ids = jax.lax.broadcasted_iota(jnp.int32, x.shape, dimension=1)
        o_ref[...] = jnp.where(layer_ids < max_layer, interp, x)
    return kernel


def _batch_block(B, bytes_per_batch_row):
    return max(1, min(B, _TARGET_BLOCK_BYTES // max(1, bytes_per_batch_row)))


def _compiler_params():
    return pltpu.CompilerParams(
        dimension_semantics=("parallel",),
        vmem_limit_bytes=32 * 1024 * 1024,
    )


def truncation(x, avg_latent, max_layer=8, threshold=0.7):
    """Pallas TPU version of StyleGAN Truncation.forward.

    x:          (B, L, D) latents (batch, layer, latent-dim).
    avg_latent: (D,) running-average latent.
    Layers with index < max_layer are lerped toward avg_latent; the remaining
    layers pass through unchanged.
    """
    B, L, D = x.shape
    avg = avg_latent.reshape(1, 1, D).astype(x.dtype)
    itemsize = jnp.dtype(x.dtype).itemsize

    ml = min(int(max_layer), L)
    if ml <= 0:
        return x  # nothing truncated

    sublane = {4: 8, 2: 16, 1: 32}.get(itemsize, 8)

    if ml == L or ml % sublane == 0:
        # -------- fast path: touch only layers < max_layer ------------------
        # The output aliases the input buffer, so layers >= max_layer are never
        # read or written and keep their original values.
        # NOTE: for full benefit wrap in jit with x donated; XLA otherwise
        # inserts one copy of x, which is still no worse than the masked path.
        bB = _batch_block(B, ml * D * itemsize)
        grid = (pl.cdiv(B, bB),)
        cost = pl.CostEstimate(
            flops=3 * B * ml * D,
            transcendentals=0,
            bytes_accessed=2 * B * ml * D * itemsize + D * itemsize,
        )
        return pl.pallas_call(
            _make_lerp_kernel(threshold),
            out_shape=jax.ShapeDtypeStruct((B, L, D), x.dtype),
            grid=grid,
            in_specs=[
                pl.BlockSpec((bB, ml, D), lambda i: (i, 0, 0)),
                pl.BlockSpec((1, 1, D), lambda i: (0, 0, 0)),
            ],
            out_specs=pl.BlockSpec((bB, ml, D), lambda i: (i, 0, 0)),
            input_output_aliases={0: 0},
            compiler_params=_compiler_params(),
            cost_estimate=cost,
        )(x, avg)

    # -------- general path: max_layer not sublane-aligned, mask in-kernel ----
    bB = _batch_block(B, L * D * itemsize)
    grid = (pl.cdiv(B, bB),)
    cost = pl.CostEstimate(
        flops=3 * B * L * D,
        transcendentals=0,
        bytes_accessed=2 * B * L * D * itemsize + D * itemsize,
    )
    return pl.pallas_call(
        _make_masked_kernel(threshold, ml),
        out_shape=jax.ShapeDtypeStruct((B, L, D), x.dtype),
        grid=grid,
        in_specs=[
            pl.BlockSpec((bB, L, D), lambda i: (i, 0, 0)),
            pl.BlockSpec((1, 1, D), lambda i: (0, 0, 0)),
        ],
        out_specs=pl.BlockSpec((bB, L, D), lambda i: (i, 0, 0)),
        compiler_params=_compiler_params(),
        cost_estimate=cost,
    )(x, avg)


def _ref_truncation(x, avg_latent, max_layer, threshold):
    interp = avg_latent[None, None, :] + threshold * (x - avg_latent[None, None, :])
    do_trunc = (jnp.arange(x.shape[1]) < max_layer)[None, :, None]
    return jnp.where(do_trunc, interp, x)


if __name__ == "__main__":
    key = jax.random.PRNGKey(0)
    k1, k2, k3, k4 = jax.random.split(key, 4)

    # 1) Fast (aliased, layer-skipping) path: max_layer multiple of 8, lane-dense D.
    B, L, D = 4, 10, 128
    max_layer, threshold = 8, 0.7
    x = jax.random.normal(k1, (B, L, D), dtype=jnp.float32)
    avg_latent = jax.random.normal(k2, (D,), dtype=jnp.float32)
    out = jax.block_until_ready(truncation(x, avg_latent, max_layer, threshold))
    ref = _ref_truncation(x, avg_latent, max_layer, threshold)
    assert jnp.allclose(out, ref, atol=1e-6), "fast-path mismatch vs reference"

    # 2) General masked path: max_layer not sublane-aligned, small D.
    B2, L2, D2 = 2, 10, 32
    ml2, th2 = 5, 0.7
    x2 = jax.random.normal(k3, (B2, L2, D2), dtype=jnp.float32)
    avg2 = jax.random.normal(k4, (D2,), dtype=jnp.float32)
    out2 = jax.block_until_ready(truncation(x2, avg2, ml2, th2))
    ref2 = _ref_truncation(x2, avg2, ml2, th2)
    assert jnp.allclose(out2, ref2, atol=1e-6), "masked-path mismatch vs reference"

    print("KERNEL_OK")
</pallas_src>

<mosaic_0001>
module attributes {stable_mosaic.version = 11 : i64} {
  func.func @kernel(%arg0: i32, %arg1: memref<4x8x128xf32, #tpu.memory_space<vmem>>, %arg2: memref<1x1x128xf32, #tpu.memory_space<vmem>>, %arg3: memref<4x8x128xf32, #tpu.memory_space<vmem>>) attributes {dimension_semantics = [#tpu.dimension_semantics<parallel>], iteration_bounds = array<i64: 1>, scalar_prefetch = 0 : i64, scratch_operands = 0 : i64, tpu.core_type = #tpu.core_type<tc>, window_params = [{transform_indices = @transform_0, window_bounds = array<i64: 4, 8, 128>}, {pipeline_mode = #tpu.pipeline_mode<synchronous>, transform_indices = @transform_1, window_bounds = array<i64: 1, 1, 128>}, {transform_indices = @transform_2, window_bounds = array<i64: 4, 8, 128>}]} {
    %c0 = arith.constant 0 : index
    %c0_0 = arith.constant 0 : index
    %c0_1 = arith.constant 0 : index
    %0 = vector.load %arg1[%c0, %c0_0, %c0_1] : memref<4x8x128xf32, #tpu.memory_space<vmem>>, vector<4x8x128xf32>
    %c0_2 = arith.constant 0 : index
    %c0_3 = arith.constant 0 : index
    %c0_4 = arith.constant 0 : index
    %1 = vector.load %arg2[%c0_2, %c0_3, %c0_4] : memref<1x1x128xf32, #tpu.memory_space<vmem>>, vector<1x1x128xf32>
    %2 = vector.broadcast %1 : vector<1x1x128xf32> to vector<4x8x128xf32>
    %3 = arith.subf %0, %2 : vector<4x8x128xf32>
    %cst = arith.constant 0.699999988 : f32
    %4 = vector.broadcast %cst : f32 to vector<4x8x128xf32>
    %5 = arith.mulf %4, %3 : vector<4x8x128xf32>
    %6 = vector.broadcast %1 : vector<1x1x128xf32> to vector<4x8x128xf32>
    %7 = arith.addf %6, %5 : vector<4x8x128xf32>
    %c0_5 = arith.constant 0 : index
    %c0_6 = arith.constant 0 : index
    %c0_7 = arith.constant 0 : index
    %8 = vector.load %arg3[%c0_5, %c0_6, %c0_7] : memref<4x8x128xf32, #tpu.memory_space<vmem>>, vector<4x8x128xf32>
    tpu.vector_store %arg3[%c0_5, %c0_6, %c0_7], %7 {strides = array<i32>} : memref<4x8x128xf32, #tpu.memory_space<vmem>>, vector<4x8x128xf32>,
    return
  }
  func.func @transform_0(%arg0: i32) -> (i32, i32, i32) {
    %c0_i32 = arith.constant 0 : i32
    %c0_i32_0 = arith.constant 0 : i32
    %c0_i32_1 = arith.constant 0 : i32
    return %arg0, %c0_i32, %c0_i32_0 : i32, i32, i32
  }
  func.func @transform_1(%arg0: i32) -> (i32, i32, i32) {
    %c0_i32 = arith.constant 0 : i32
    %c0_i32_0 = arith.constant 0 : i32
    %c0_i32_1 = arith.constant 0 : i32
    %c0_i32_2 = arith.constant 0 : i32
    return %c0_i32, %c0_i32_0, %c0_i32_1 : i32, i32, i32
  }
  func.func @transform_2(%arg0: i32) -> (i32, i32, i32) {
    %c0_i32 = arith.constant 0 : i32
    %c0_i32_0 = arith.constant 0 : i32
    %c0_i32_1 = arith.constant 0 : i32
    return %arg0, %c0_i32, %c0_i32_0 : i32, i32, i32
  }
}

</mosaic_0001>

<llo_original>
// kernel: tpu_custom_call.1
$region0: #{tpu_custom_call.1}
  #allocation0 [shape = 'u32[]', space=smem, size = 0x4, offset = 0x4, fixed_abs, tag = 'smem constant byte address 0x4 - core index']
  #allocation1 [shape = 'u32[144,128]{1,0:T(1,128)}', space=vmem, size = 0x12000, scoped, tag = 'internal scratch']
  %s0 = inlined_call_operand.vmem [shape: f32[4,10,128], index: 0, kind: input, shape index: {}, may-alias: {0,2}]
  %s1 = inlined_call_operand.vmem [shape: f32[1,1,128], index: 1, kind: input, shape index: {}]
  %s2 = inlined_call_operand.vmem [shape: f32[4,10,128], index: 2, kind: output, shape index: {}, may-alias: {0,2}]
  %s3 = sld [smem:[#allocation0]]
  $region90: #{tpu_custom_call.1} parent=0
    _
  %s5 = ssub.s32 1, %s3
  %s6 = scalar_select 0, %s5, %s3
  $region1: #{tpu_custom_call.1} parent=0
    #allocation2 [shape = 'u8[16384]{0}', space=vmem, size = 0x4000, scoped, tag = 'input window, operand 0, single buffered']
    #allocation3 [shape = 'u8[16384]{0}', space=vmem, size = 0x4000, scoped, tag = 'output window, operand 0, single buffered']
    // Predicated region
    $region2: #{tpu_custom_call.1} parent=1 // pred_check
      _
    $region3: #{tpu_custom_call.1} parent=1 // pred_check_branch
      %8 = sbr.rel (0) target = $region5
    $region4: #{tpu_custom_call.1} parent=1 // pred_region
      // Predicated region
      $region6: #{tpu_custom_call.1} parent=4 // pred_check
        _
      $region7: #{tpu_custom_call.1} parent=4 // pred_check_branch
        %10 = sbr.rel (0) target = $region9
      $region8: #{tpu_custom_call.1} parent=4 // pred_region
        // Predicated region
        $region10: #{tpu_custom_call.1} parent=8 // pred_check
          _
        $region11: #{tpu_custom_call.1} parent=8 // pred_check_branch
          %12 = sbr.rel (0) target = $region13
        $region12: #{tpu_custom_call.1} parent=8 // pred_region
          // Predicated region
          $region25: #{tpu_custom_call.1} parent=12 // pred_check
            _
          $region26: #{tpu_custom_call.1} parent=12 // pred_check_branch
            %33 = sbr.rel (0) target = $region28
          $region27: #{tpu_custom_call.1} parent=12 // pred_region
            loop: start=0, step=1, limit=1
            $region29: #{tpu_custom_call.1} parent=27 // loop_pre_header
              _
            $region30: #{tpu_custom_call.1} parent=27 // loop_header
              %s35 = sphi 0, %s39
              %p36 = scmp.ge.s32.totalorder %s35, 1
              %s40 = sphi %s0, %s0
              %s41 = sphi [#allocation2], [#allocation2]
            $region31: #{tpu_custom_call.1} parent=27 // loop_header_branch
              %38 = sbr.rel (%p36) target = $region35
            $region32: #{tpu_custom_call.1} parent=27 // loop_body
              %v42 = vld [vmem:[%s40] sm:$0xff]
              %43 = vst [vmem:[%s41] sm:$0xff] %v42
              %v44 = vld [vmem:[%s40 + $0x10] sm:$0xff]
              %45 = vst [vmem:[%s41 + $0x8] sm:$0xff] %v44
              %v46 = vld [vmem:[%s40 + $0x20] sm:$0xff]
              %47 = vst [vmem:[%s41 + $0x10] sm:$0xff] %v46
              %v48 = vld [vmem:[%s40 + $0x30] sm:$0xff]
              %49 = vst [vmem:[%s41 + $0x18] sm:$0xff] %v48
            $region33: #{tpu_custom_call.1} parent=27 // loop_footer
              %s39 = sadd.s32 1, %s35
            $region34: #{tpu_custom_call.1} parent=27 // loop_footer_branch
              %34 = sbr.rel target = $region30
            $region35: #{tpu_custom_call.1} parent=27 // loop_exit
              _
          $region28: #{tpu_custom_call.1} parent=12 // pred_fallthru
            _
          // Predicated region
          $region36: #{tpu_custom_call.1} parent=12 // pred_check
            _
          $region37: #{tpu_custom_call.1} parent=12 // pred_check_branch
            %51 = sbr.rel target = $region39
          $region38: #{tpu_custom_call.1} parent=12 // pred_region
            _
          $region39: #{tpu_custom_call.1} parent=12 // pred_fallthru
            _
        $region13: #{tpu_custom_call.1} parent=8 // pred_fallthru
          _
        // Predicated region
        $region14: #{tpu_custom_call.1} parent=8 // pred_check
          _
        $region15: #{tpu_custom_call.1} parent=8 // pred_check_branch
          %14 = sbr.rel target = $region17
        $region16: #{tpu_custom_call.1} parent=8 // pred_region
          loop: start=0, step=1, limit=1
          $region18: #{tpu_custom_call.1} parent=16 // loop_pre_header
            _
          $region19: #{tpu_custom_call.1} parent=16 // loop_header
            %s17 = sphi 0, %s21
            %p18 = scmp.ge.s32.totalorder %s17, 1
            %s22 = sphi %s0, %s0
            %s23 = sphi [#allocation2], [#allocation2]
          $region20: #{tpu_custom_call.1} parent=16 // loop_header_branch
            %20 = sbr.rel (%p18) target = $region24
          $region21: #{tpu_custom_call.1} parent=16 // loop_body
            %v24 = vld [vmem:[%s22] sm:$0xff]
            %25 = vst [vmem:[%s23] sm:$0xff] %v24
            %v26 = vld [vmem:[%s22 + $0x10] sm:$0xff]
            %27 = vst [vmem:[%s23 + $0x8] sm:$0xff] %v26
            %v28 = vld [vmem:[%s22 + $0x20] sm:$0xff]
            %29 = vst [vmem:[%s23 + $0x10] sm:$0xff] %v28
            %v30 = vld [vmem:[%s22 + $0x30] sm:$0xff]
            %31 = vst [vmem:[%s23 + $0x18] sm:$0xff] %v30
          $region22: #{tpu_custom_call.1} parent=16 // loop_footer
            %s21 = sadd.s32 1, %s17
          $region23: #{tpu_custom_call.1} parent=16 // loop_footer_branch
            %16 = sbr.rel target = $region19
          $region24: #{tpu_custom_call.1} parent=16 // loop_exit
            _
        $region17: #{tpu_custom_call.1} parent=8 // pred_fallthru
          _
      $region9: #{tpu_custom_call.1} parent=4 // pred_fallthru
        _
      %52 = vnop
    $region5: #{tpu_custom_call.1} parent=1 // pred_fallthru
      _
    // Predicated region
    $region40: #{tpu_custom_call.1} parent=1 // pred_check
      _
    $region41: #{tpu_custom_call.1} parent=1 // pred_check_branch
      %54 = sbr.rel (0) target = $region43
    $region42: #{tpu_custom_call.1} parent=1 // pred_region
      _
    $region43: #{tpu_custom_call.1} parent=1 // pred_fallthru
      _
    // Predicated region
    $region44: #{tpu_custom_call.1} parent=1 // pred_check
      _
    $region45: #{tpu_custom_call.1} parent=1 // pred_check_branch
      %56 = sbr.rel (0) target = $region47
    $region46: #{tpu_custom_call.1} parent=1 // pred_region
      _
    $region47: #{tpu_custom_call.1} parent=1 // pred_fallthru
      _
    %v57 = vld [vmem:[#allocation2] sm:$0xff]
    %v58 = vld [vmem:[#allocation2 + $0x8] sm:$0xff]
    %v59 = vld [vmem:[#allocation2 + $0x10] sm:$0xff]
    %v60 = vld [vmem:[#allocation2 + $0x18] sm:$0xff]
    %v61 = vld [vmem:[%s1] sm:$0x1]
    %v63 = vlaneseq
    %v64 = vshrl.u32 %v63, 7
    %v65 = vsub.s32 0, %v64
    %v66 = vrot.slane %v61, %v65
    %v68 = vsub.f32 %v57, %v66
    %v69 = vsub.f32 %v58, %v66
    %v70 = vsub.f32 %v59, %v66
    %v71 = vsub.f32 %v60, %v66
    %v72 = vmul.f32 %v68, 0.7
    %v73 = vmul.f32 %v69, 0.7
    %v74 = vmul.f32 %v70, 0.7
    %v75 = vmul.f32 %v71, 0.7
    %v76 = vadd.f32 %v66, %v72
    %v77 = vadd.f32 %v66, %v73
    %v78 = vadd.f32 %v66, %v74
    %v79 = vadd.f32 %v66, %v75
    %80 = vst [vmem:[#allocation3] sm:$0xff] %v76
    %81 = vst [vmem:[#allocation3 + $0x8] sm:$0xff] %v77
    %82 = vst [vmem:[#allocation3 + $0x10] sm:$0xff] %v78
    %83 = vst [vmem:[#allocation3 + $0x18] sm:$0xff] %v79
    // Predicated region
    $region48: #{tpu_custom_call.1} parent=1 // pred_check
      _
    $region49: #{tpu_custom_call.1} parent=1 // pred_check_branch
      %85 = sbr.rel (0) target = $region51
    $region50: #{tpu_custom_call.1} parent=1 // pred_region
      // Predicated region
      $region52: #{tpu_custom_call.1} parent=50 // pred_check
        _
      $region53: #{tpu_custom_call.1} parent=50 // pred_check_branch
        %87 = sbr.rel (0) target = $region55
      $region54: #{tpu_custom_call.1} parent=50 // pred_region
        // Predicated region
        $region56: #{tpu_custom_call.1} parent=54 // pred_check
          _
        $region57: #{tpu_custom_call.1} parent=54 // pred_check_branch
          %89 = sbr.rel (0) target = $region59
        $region58: #{tpu_custom_call.1} parent=54 // pred_region
          // Predicated region
          $region71: #{tpu_custom_call.1} parent=58 // pred_check
            _
          $region72: #{tpu_custom_call.1} parent=58 // pred_check_branch
            %110 = sbr.rel (0) target = $region74
          $region73: #{tpu_custom_call.1} parent=58 // pred_region
            loop: start=0, step=1, limit=1
            $region75: #{tpu_custom_call.1} parent=73 // loop_pre_header
              _
            $region76: #{tpu_custom_call.1} parent=73 // loop_header
              %s112 = sphi 0, %s116
              %p113 = scmp.ge.s32.totalorder %s112, 1
              %s117 = sphi [#allocation3], [#allocation3]
              %s118 = sphi %s2, %s2
            $region77: #{tpu_custom_call.1} parent=73 // loop_header_branch
              %115 = sbr.rel (%p113) target = $region81
            $region78: #{tpu_custom_call.1} parent=73 // loop_body
              %v119 = vld [vmem:[%s117] sm:$0xff]
              %120 = vst [vmem:[%s118] sm:$0xff] %v119
              %v121 = vld [vmem:[%s117 + $0x8] sm:$0xff]
              %122 = vst [vmem:[%s118 + $0x10] sm:$0xff] %v121
              %v123 = vld [vmem:[%s117 + $0x10] sm:$0xff]
              %124 = vst [vmem:[%s118 + $0x20] sm:$0xff] %v123
              %v125 = vld [vmem:[%s117 + $0x18] sm:$0xff]
              %126 = vst [vmem:[%s118 + $0x30] sm:$0xff] %v125
            $region79: #{tpu_custom_call.1} parent=73 // loop_footer
              %s116 = sadd.s32 1, %s112
            $region80: #{tpu_custom_call.1} parent=73 // loop_footer_branch
              %111 = sbr.rel target = $region76
            $region81: #{tpu_custom_call.1} parent=73 // loop_exit
              _
          $region74: #{tpu_custom_call.1} parent=58 // pred_fallthru
            _
          // Predicated region
          $region82: #{tpu_custom_call.1} parent=58 // pred_check
            _
          $region83: #{tpu_custom_call.1} parent=58 // pred_check_branch
            %128 = sbr.rel target = $region85
          $region84: #{tpu_custom_call.1} parent=58 // pred_region
            _
          $region85: #{tpu_custom_call.1} parent=58 // pred_fallthru
            _
        $region59: #{tpu_custom_call.1} parent=54 // pred_fallthru
          _
        // Predicated region
        $region60: #{tpu_custom_call.1} parent=54 // pred_check
          _
        $region61: #{tpu_custom_call.1} parent=54 // pred_check_branch
          %91 = sbr.rel target = $region63
        $region62: #{tpu_custom_call.1} parent=54 // pred_region
          loop: start=0, step=1, limit=1
          $region64: #{tpu_custom_call.1} parent=62 // loop_pre_header
            _
          $region65: #{tpu_custom_call.1} parent=62 // loop_header
            %s94 = sphi 0, %s98
            %p95 = scmp.ge.s32.totalorder %s94, 1
            %s99 = sphi [#allocation3], [#allocation3]
            %s100 = sphi %s2, %s2
          $region66: #{tpu_custom_call.1} parent=62 // loop_header_branch
            %97 = sbr.rel (%p95) target = $region70
          $region67: #{tpu_custom_call.1} parent=62 // loop_body
            %v101 = vld [vmem:[%s99] sm:$0xff]
            %102 = vst [vmem:[%s100] sm:$0xff] %v101
            %v103 = vld [vmem:[%s99 + $0x8] sm:$0xff]
            %104 = vst [vmem:[%s100 + $0x10] sm:$0xff] %v103
            %v105 = vld [vmem:[%s99 + $0x10] sm:$0xff]
            %106 = vst [vmem:[%s100 + $0x20] sm:$0xff] %v105
            %v107 = vld [vmem:[%s99 + $0x18] sm:$0xff]
            %108 = vst [vmem:[%s100 + $0x30] sm:$0xff] %v107
          $region68: #{tpu_custom_call.1} parent=62 // loop_footer
            %s98 = sadd.s32 1, %s94
          $region69: #{tpu_custom_call.1} parent=62 // loop_footer_branch
            %93 = sbr.rel target = $region65
          $region70: #{tpu_custom_call.1} parent=62 // loop_exit
            _
        $region63: #{tpu_custom_call.1} parent=54 // pred_fallthru
          _
      $region55: #{tpu_custom_call.1} parent=50 // pred_fallthru
        _
      %129 = vnop
    $region51: #{tpu_custom_call.1} parent=1 // pred_fallthru
      _
    // Predicated region
    $region86: #{tpu_custom_call.1} parent=1 // pred_check
      _
    $region87: #{tpu_custom_call.1} parent=1 // pred_check_branch
      %131 = sbr.rel (0) target = $region89
    $region88: #{tpu_custom_call.1} parent=1 // pred_region
      _
    $region89: #{tpu_custom_call.1} parent=1 // pred_fallthru
      _

</llo_original>
